<compile_context>
chip_gen: v7x
topology: tpu7x:2x2x1
jax: 0.10.0
libtpu: 0.0.40
codegen_flags: <defaults>
</compile_context>

<pallas_src>
import functools

import jax
import jax.numpy as jnp
from jax.experimental import pallas as pl
from jax.experimental.pallas import tpu as pltpu

_LANE = 128


def _outconv_kernel(x_ref, w_ref, b_ref, o_ref):
    # x_ref: (C_in, T) VMEM   w_ref: (C_out, C_in) SMEM   b_ref: (C_out,) SMEM
    # o_ref: (C_out, T) VMEM
    c_out, c_in = w_ref.shape
    # Tiny channel contraction: unrolled scalar*vector multiply-adds on the VPU.
    for o in range(c_out):
        acc = x_ref[0:1, :] * w_ref[o, 0]
        for c in range(1, c_in):
            acc = acc + x_ref[c:c + 1, :] * w_ref[o, c]
        acc = acc + b_ref[o]
        # Sigmoid in-register (exp on the EUP), one lane-dense store per row.
        o_ref[o:o + 1, :] = jax.nn.sigmoid(acc).astype(o_ref.dtype)


@functools.partial(jax.jit, static_argnames=("max_tile_hw",))
def outconv_forward(x_nchw, weight, bias, *, max_tile_hw=2048):
    """1x1 conv + sigmoid.

    x_nchw: (N, C_in, H, W)   float32
    weight: (C_out, C_in)     float32  (kernel_size=1 conv weight squeezed)
    bias:   (C_out,)          float32
    returns (N, C_out, H, W)  float32
    """
    n, c_in, h, w = x_nchw.shape
    c_out = weight.shape[0]
    hw = h * w

    # Lane-dense tile along H*W (multiple of 128), as large as reasonable.
    hw_lanes = -(-hw // _LANE) * _LANE
    tile_hw = min(max_tile_hw, hw_lanes)
    num_hw_tiles = -(-hw // tile_hw)
    hw_pad = num_hw_tiles * tile_hw

    # NCHW -> (N, C_in, H*W); no transpose, no extra HBM pass.
    x3 = x_nchw.reshape(n, c_in, hw)
    if hw_pad != hw:
        x3 = jnp.pad(x3, ((0, 0), (0, 0), (0, hw_pad - hw)))

    out3 = pl.pallas_call(
        _outconv_kernel,
        out_shape=jax.ShapeDtypeStruct((n, c_out, hw_pad), x_nchw.dtype),
        grid=(n, num_hw_tiles),
        in_specs=[
            # Batch dim squeezed; (C_in, tile_hw) block with spatial on lanes.
            pl.BlockSpec((None, c_in, tile_hw), lambda i, t: (i, 0, t)),
            # Tiny weight/bias stay resident in SMEM (scalar reads, no DMA
            # stream per grid step).
            pl.BlockSpec(memory_space=pltpu.MemorySpace.SMEM),
            pl.BlockSpec(memory_space=pltpu.MemorySpace.SMEM),
        ],
        out_specs=pl.BlockSpec((None, c_out, tile_hw), lambda i, t: (i, 0, t)),
        compiler_params=pltpu.CompilerParams(
            dimension_semantics=("parallel", "parallel")),
    )(x3, weight, bias)

    if hw_pad != hw:
        out3 = out3[:, :, :hw]
    # Already channel-major: just fold H*W back to (H, W).
    return out3.reshape(n, c_out, h, w)


if __name__ == "__main__":
    # Shapes implied by the module: small batch/channels/spatial.
    N, C_IN, C_OUT, H, W = 2, 4, 3, 16, 16

    key = jax.random.PRNGKey(0)
    kx, kw, kb = jax.random.split(key, 3)

    x = jax.random.normal(kx, (N, C_IN, H, W), dtype=jnp.float32)

    # Deterministic parameter init (mimics PyTorch's uniform(-bound, bound)
    # with bound = 1/sqrt(fan_in) for a 1x1 conv).
    bound = 1.0 / jnp.sqrt(jnp.float32(C_IN))
    weight = jax.random.uniform(kw, (C_OUT, C_IN), jnp.float32, -bound, bound)
    bias = jax.random.uniform(kb, (C_OUT,), jnp.float32, -bound, bound)

    out = outconv_forward(x, weight, bias)
    jax.block_until_ready(out)

    # Sanity check against plain-JAX reference (1x1 conv == channel matmul).
    ref = jax.nn.sigmoid(
        jnp.einsum("nchw,oc->nohw", x, weight) + bias[None, :, None, None])
    assert out.shape == (N, C_OUT, H, W)
    assert jnp.allclose(out, ref, atol=1e-5, rtol=1e-5)

    print("KERNEL_OK")
</pallas_src>

<mosaic_0001>
module attributes {stable_mosaic.version = 11 : i64} {
  func.func @_outconv_kernel(%arg0: i32, %arg1: i32, %arg2: memref<1x4x256xf32, #tpu.memory_space<vmem>>, %arg3: memref<3x4xf32, #tpu.memory_space<smem>>, %arg4: memref<3xf32, #tpu.memory_space<smem>>, %arg5: memref<1x3x256xf32, #tpu.memory_space<vmem>>) attributes {dimension_semantics = [#tpu.dimension_semantics<parallel>, #tpu.dimension_semantics<parallel>], iteration_bounds = array<i64: 2, 1>, scalar_prefetch = 0 : i64, scratch_operands = 0 : i64, tpu.core_type = #tpu.core_type<tc>, window_params = [{transform_indices = @transform_0, window_bounds = array<i64: 1, 4, 256>}, {transform_indices = @transform_1, window_bounds = array<i64: 3, 4>}, {transform_indices = @transform_2, window_bounds = array<i64: 3>}, {transform_indices = @transform_3, window_bounds = array<i64: 1, 3, 256>}]} {
    %c0 = arith.constant 0 : index
    %c0_0 = arith.constant 0 : index
    %c0_1 = arith.constant 0 : index
    %0 = vector.load %arg2[%c0, %c0_0, %c0_1] : memref<1x4x256xf32, #tpu.memory_space<vmem>>, vector<1x1x256xf32>
    %1 = vector.shape_cast %0 : vector<1x1x256xf32> to vector<1x256xf32>
    %c0_2 = arith.constant 0 : index
    %c0_3 = arith.constant 0 : index
    %2 = memref.load %arg3[%c0_2, %c0_3] : memref<3x4xf32, #tpu.memory_space<smem>>
    %3 = vector.broadcast %2 : f32 to vector<1x256xf32>
    %4 = arith.mulf %1, %3 : vector<1x256xf32>
    %c0_4 = arith.constant 0 : index
    %c1 = arith.constant 1 : index
    %c0_5 = arith.constant 0 : index
    %5 = vector.load %arg2[%c0_4, %c1, %c0_5] : memref<1x4x256xf32, #tpu.memory_space<vmem>>, vector<1x1x256xf32>
    %6 = vector.shape_cast %5 : vector<1x1x256xf32> to vector<1x256xf32>
    %c0_6 = arith.constant 0 : index
    %c1_7 = arith.constant 1 : index
    %7 = memref.load %arg3[%c0_6, %c1_7] : memref<3x4xf32, #tpu.memory_space<smem>>
    %8 = vector.broadcast %7 : f32 to vector<1x256xf32>
    %9 = arith.mulf %6, %8 : vector<1x256xf32>
    %10 = arith.addf %4, %9 : vector<1x256xf32>
    %c0_8 = arith.constant 0 : index
    %c2 = arith.constant 2 : index
    %c0_9 = arith.constant 0 : index
    %11 = vector.load %arg2[%c0_8, %c2, %c0_9] : memref<1x4x256xf32, #tpu.memory_space<vmem>>, vector<1x1x256xf32>
    %12 = vector.shape_cast %11 : vector<1x1x256xf32> to vector<1x256xf32>
    %c0_10 = arith.constant 0 : index
    %c2_11 = arith.constant 2 : index
    %13 = memref.load %arg3[%c0_10, %c2_11] : memref<3x4xf32, #tpu.memory_space<smem>>
    %14 = vector.broadcast %13 : f32 to vector<1x256xf32>
    %15 = arith.mulf %12, %14 : vector<1x256xf32>
    %16 = arith.addf %10, %15 : vector<1x256xf32>
    %c0_12 = arith.constant 0 : index
    %c3 = arith.constant 3 : index
    %c0_13 = arith.constant 0 : index
    %17 = vector.load %arg2[%c0_12, %c3, %c0_13] : memref<1x4x256xf32, #tpu.memory_space<vmem>>, vector<1x1x256xf32>
    %18 = vector.shape_cast %17 : vector<1x1x256xf32> to vector<1x256xf32>
    %c0_14 = arith.constant 0 : index
    %c3_15 = arith.constant 3 : index
    %19 = memref.load %arg3[%c0_14, %c3_15] : memref<3x4xf32, #tpu.memory_space<smem>>
    %20 = vector.broadcast %19 : f32 to vector<1x256xf32>
    %21 = arith.mulf %18, %20 : vector<1x256xf32>
    %22 = arith.addf %16, %21 : vector<1x256xf32>
    %c0_16 = arith.constant 0 : index
    %23 = memref.load %arg4[%c0_16] : memref<3xf32, #tpu.memory_space<smem>>
    %24 = vector.broadcast %23 : f32 to vector<1x256xf32>
    %25 = arith.addf %22, %24 : vector<1x256xf32>
    %26 = arith.negf %25 : vector<1x256xf32>
    %27 = math.exp %26 : vector<1x256xf32>
    %cst = arith.constant 1.000000e+00 : f32
    %28 = vector.broadcast %cst : f32 to vector<1x256xf32>
    %29 = arith.addf %28, %27 : vector<1x256xf32>
    %30 = arith.divf %28, %29 : vector<1x256xf32>
    %c0_17 = arith.constant 0 : index
    %c0_18 = arith.constant 0 : index
    %c0_19 = arith.constant 0 : index
    %31 = vector.load %arg5[%c0_17, %c0_18, %c0_19] : memref<1x3x256xf32, #tpu.memory_space<vmem>>, vector<1x1x256xf32>
    %32 = vector.shape_cast %31 : vector<1x1x256xf32> to vector<1x256xf32>
    %33 = vector.shape_cast %30 : vector<1x256xf32> to vector<1x1x256xf32>
    tpu.vector_store %arg5[%c0_17, %c0_18, %c0_19], %33 {strides = array<i32>} : memref<1x3x256xf32, #tpu.memory_space<vmem>>, vector<1x1x256xf32>,
    %c0_20 = arith.constant 0 : index
    %c0_21 = arith.constant 0 : index
    %c0_22 = arith.constant 0 : index
    %34 = vector.load %arg2[%c0_20, %c0_21, %c0_22] : memref<1x4x256xf32, #tpu.memory_space<vmem>>, vector<1x1x256xf32>
    %35 = vector.shape_cast %34 : vector<1x1x256xf32> to vector<1x256xf32>
    %c1_23 = arith.constant 1 : index
    %c0_24 = arith.constant 0 : index
    %36 = memref.load %arg3[%c1_23, %c0_24] : memref<3x4xf32, #tpu.memory_space<smem>>
    %37 = vector.broadcast %36 : f32 to vector<1x256xf32>
    %38 = arith.mulf %35, %37 : vector<1x256xf32>
    %c0_25 = arith.constant 0 : index
    %c1_26 = arith.constant 1 : index
    %c0_27 = arith.constant 0 : index
    %39 = vector.load %arg2[%c0_25, %c1_26, %c0_27] : memref<1x4x256xf32, #tpu.memory_space<vmem>>, vector<1x1x256xf32>
    %40 = vector.shape_cast %39 : vector<1x1x256xf32> to vector<1x256xf32>
    %c1_28 = arith.constant 1 : index
    %c1_29 = arith.constant 1 : index
    %41 = memref.load %arg3[%c1_28, %c1_29] : memref<3x4xf32, #tpu.memory_space<smem>>
    %42 = vector.broadcast %41 : f32 to vector<1x256xf32>
    %43 = arith.mulf %40, %42 : vector<1x256xf32>
    %44 = arith.addf %38, %43 : vector<1x256xf32>
    %c0_30 = arith.constant 0 : index
    %c2_31 = arith.constant 2 : index
    %c0_32 = arith.constant 0 : index
    %45 = vector.load %arg2[%c0_30, %c2_31, %c0_32] : memref<1x4x256xf32, #tpu.memory_space<vmem>>, vector<1x1x256xf32>
    %46 = vector.shape_cast %45 : vector<1x1x256xf32> to vector<1x256xf32>
    %c1_33 = arith.constant 1 : index
    %c2_34 = arith.constant 2 : index
    %47 = memref.load %arg3[%c1_33, %c2_34] : memref<3x4xf32, #tpu.memory_space<smem>>
    %48 = vector.broadcast %47 : f32 to vector<1x256xf32>
    %49 = arith.mulf %46, %48 : vector<1x256xf32>
    %50 = arith.addf %44, %49 : vector<1x256xf32>
    %c0_35 = arith.constant 0 : index
    %c3_36 = arith.constant 3 : index
    %c0_37 = arith.constant 0 : index
    %51 = vector.load %arg2[%c0_35, %c3_36, %c0_37] : memref<1x4x256xf32, #tpu.memory_space<vmem>>, vector<1x1x256xf32>
    %52 = vector.shape_cast %51 : vector<1x1x256xf32> to vector<1x256xf32>
    %c1_38 = arith.constant 1 : index
    %c3_39 = arith.constant 3 : index
    %53 = memref.load %arg3[%c1_38, %c3_39] : memref<3x4xf32, #tpu.memory_space<smem>>
    %54 = vector.broadcast %53 : f32 to vector<1x256xf32>
    %55 = arith.mulf %52, %54 : vector<1x256xf32>
    %56 = arith.addf %50, %55 : vector<1x256xf32>
    %c1_40 = arith.constant 1 : index
    %57 = memref.load %arg4[%c1_40] : memref<3xf32, #tpu.memory_space<smem>>
    %58 = vector.broadcast %57 : f32 to vector<1x256xf32>
    %59 = arith.addf %56, %58 : vector<1x256xf32>
    %60 = arith.negf %59 : vector<1x256xf32>
    %61 = math.exp %60 : vector<1x256xf32>
    %cst_41 = arith.constant 1.000000e+00 : f32
    %62 = vector.broadcast %cst_41 : f32 to vector<1x256xf32>
    %63 = arith.addf %62, %61 : vector<1x256xf32>
    %64 = arith.divf %62, %63 : vector<1x256xf32>
    %c0_42 = arith.constant 0 : index
    %c1_43 = arith.constant 1 : index
    %c0_44 = arith.constant 0 : index
    %65 = vector.load %arg5[%c0_42, %c1_43, %c0_44] : memref<1x3x256xf32, #tpu.memory_space<vmem>>, vector<1x1x256xf32>
    %66 = vector.shape_cast %65 : vector<1x1x256xf32> to vector<1x256xf32>
    %67 = vector.shape_cast %64 : vector<1x256xf32> to vector<1x1x256xf32>
    tpu.vector_store %arg5[%c0_42, %c1_43, %c0_44], %67 {strides = array<i32>} : memref<1x3x256xf32, #tpu.memory_space<vmem>>, vector<1x1x256xf32>,
    %c0_45 = arith.constant 0 : index
    %c0_46 = arith.constant 0 : index
    %c0_47 = arith.constant 0 : index
    %68 = vector.load %arg2[%c0_45, %c0_46, %c0_47] : memref<1x4x256xf32, #tpu.memory_space<vmem>>, vector<1x1x256xf32>
    %69 = vector.shape_cast %68 : vector<1x1x256xf32> to vector<1x256xf32>
    %c2_48 = arith.constant 2 : index
    %c0_49 = arith.constant 0 : index
    %70 = memref.load %arg3[%c2_48, %c0_49] : memref<3x4xf32, #tpu.memory_space<smem>>
    %71 = vector.broadcast %70 : f32 to vector<1x256xf32>
    %72 = arith.mulf %69, %71 : vector<1x256xf32>
    %c0_50 = arith.constant 0 : index
    %c1_51 = arith.constant 1 : index
    %c0_52 = arith.constant 0 : index
    %73 = vector.load %arg2[%c0_50, %c1_51, %c0_52] : memref<1x4x256xf32, #tpu.memory_space<vmem>>, vector<1x1x256xf32>
    %74 = vector.shape_cast %73 : vector<1x1x256xf32> to vector<1x256xf32>
    %c2_53 = arith.constant 2 : index
    %c1_54 = arith.constant 1 : index
    %75 = memref.load %arg3[%c2_53, %c1_54] : memref<3x4xf32, #tpu.memory_space<smem>>
    %76 = vector.broadcast %75 : f32 to vector<1x256xf32>
    %77 = arith.mulf %74, %76 : vector<1x256xf32>
    %78 = arith.addf %72, %77 : vector<1x256xf32>
    %c0_55 = arith.constant 0 : index
    %c2_56 = arith.constant 2 : index
    %c0_57 = arith.constant 0 : index
    %79 = vector.load %arg2[%c0_55, %c2_56, %c0_57] : memref<1x4x256xf32, #tpu.memory_space<vmem>>, vector<1x1x256xf32>
    %80 = vector.shape_cast %79 : vector<1x1x256xf32> to vector<1x256xf32>
    %c2_58 = arith.constant 2 : index
    %c2_59 = arith.constant 2 : index
    %81 = memref.load %arg3[%c2_58, %c2_59] : memref<3x4xf32, #tpu.memory_space<smem>>
    %82 = vector.broadcast %81 : f32 to vector<1x256xf32>
    %83 = arith.mulf %80, %82 : vector<1x256xf32>
    %84 = arith.addf %78, %83 : vector<1x256xf32>
    %c0_60 = arith.constant 0 : index
    %c3_61 = arith.constant 3 : index
    %c0_62 = arith.constant 0 : index
    %85 = vector.load %arg2[%c0_60, %c3_61, %c0_62] : memref<1x4x256xf32, #tpu.memory_space<vmem>>, vector<1x1x256xf32>
    %86 = vector.shape_cast %85 : vector<1x1x256xf32> to vector<1x256xf32>
    %c2_63 = arith.constant 2 : index
    %c3_64 = arith.constant 3 : index
    %87 = memref.load %arg3[%c2_63, %c3_64] : memref<3x4xf32, #tpu.memory_space<smem>>
    %88 = vector.broadcast %87 : f32 to vector<1x256xf32>
    %89 = arith.mulf %86, %88 : vector<1x256xf32>
    %90 = arith.addf %84, %89 : vector<1x256xf32>
    %c2_65 = arith.constant 2 : index
    %91 = memref.load %arg4[%c2_65] : memref<3xf32, #tpu.memory_space<smem>>
    %92 = vector.broadcast %91 : f32 to vector<1x256xf32>
    %93 = arith.addf %90, %92 : vector<1x256xf32>
    %94 = arith.negf %93 : vector<1x256xf32>
    %95 = math.exp %94 : vector<1x256xf32>
    %cst_66 = arith.constant 1.000000e+00 : f32
    %96 = vector.broadcast %cst_66 : f32 to vector<1x256xf32>
    %97 = arith.addf %96, %95 : vector<1x256xf32>
    %98 = arith.divf %96, %97 : vector<1x256xf32>
    %c0_67 = arith.constant 0 : index
    %c2_68 = arith.constant 2 : index
    %c0_69 = arith.constant 0 : index
    %99 = vector.load %arg5[%c0_67, %c2_68, %c0_69] : memref<1x3x256xf32, #tpu.memory_space<vmem>>, vector<1x1x256xf32>
    %100 = vector.shape_cast %99 : vector<1x1x256xf32> to vector<1x256xf32>
    %101 = vector.shape_cast %98 : vector<1x256xf32> to vector<1x1x256xf32>
    tpu.vector_store %arg5[%c0_67, %c2_68, %c0_69], %101 {strides = array<i32>} : memref<1x3x256xf32, #tpu.memory_space<vmem>>, vector<1x1x256xf32>,
    return
  }
  func.func @transform_0(%arg0: i32, %arg1: i32) -> (i32, i32, i32) {
    %c0_i32 = arith.constant 0 : i32
    %c0_i32_0 = arith.constant 0 : i32
    return %arg0, %c0_i32, %arg1 : i32, i32, i32
  }
  func.func @transform_1(%arg0: i32, %arg1: i32) -> (i32, i32) {
    %c0_i32 = arith.constant 0 : i32
    %c0_i32_0 = arith.constant 0 : i32
    %c0_i32_1 = arith.constant 0 : i32
    return %c0_i32, %c0_i32_0 : i32, i32
  }
  func.func @transform_2(%arg0: i32, %arg1: i32) -> i32 {
    %c0_i32 = arith.constant 0 : i32
    %c0_i32_0 = arith.constant 0 : i32
    return %c0_i32 : i32
  }
  func.func @transform_3(%arg0: i32, %arg1: i32) -> (i32, i32, i32) {
    %c0_i32 = arith.constant 0 : i32
    %c0_i32_0 = arith.constant 0 : i32
    return %arg0, %c0_i32, %arg1 : i32, i32, i32
  }
}

</mosaic_0001>

<llo_original>
// kernel: outconv_forward.1
$region0: #{outconv_forward.1}
  #allocation0 [shape = 'u32[]', space=smem, size = 0x4, offset = 0x4, fixed_abs, tag = 'smem constant byte address 0x4 - core index']
  #allocation1 [shape = 'u32[144,128]{1,0:T(1,128)}', space=vmem, size = 0x12000, scoped, tag = 'internal scratch']
  %s0 = inlined_call_operand.vmem [shape: f32[2,4,256], index: 0, kind: input, shape index: {}]
  %s1 = inlined_call_operand.vmem [shape: f32[3,4], index: 1, kind: input, shape index: {}]
  %s2 = inlined_call_operand.vmem [shape: f32[3], index: 2, kind: input, shape index: {}]
  %s3 = inlined_call_operand.vmem [shape: f32[2,3,256], index: 3, kind: output, shape index: {}]
  %s4 = sld [smem:[#allocation0]]
  $region53: #{outconv_forward.1} parent=0
    _
  %s6 = ssub.s32 1, %s4
  %s7 = scalar_select 0, %s6, %s4
  $region1: #{outconv_forward.1} parent=0
    #allocation2 [shape = 'u8[2048]{0}', space=smem, size = 0x800, scoped, tag = 'input window, operand 1, single buffered']
    #allocation3 [shape = 's32[2]{0}', space=sflag, size = 0x8, scoped, tag = 'scoped memory for outconv_forward.1']
    #allocation4 [shape = 'u8[512]{0}', space=smem, size = 0x200, scoped, tag = 'input window, operand 2, single buffered']
    #allocation5 [shape = 's32[1]{0}', space=sflag, size = 0x4, scoped, tag = 'scoped memory for outconv_forward.1']
    %8 = vsyncpa [#allocation3], 0
    %9 = vsyncpa [#allocation5], 0
    loop: start=0, step=1, limit=4
    $region2: #{outconv_forward.1} parent=1 // loop_pre_header
      _
    $region3: #{outconv_forward.1} parent=1 // loop_header
      %s11 = sphi 0, %s15
      %p12 = scmp.ge.s32.totalorder %s11, 4
      %s18 = sphi 0, %s30
      %s19 = sphi 0, %s26
      %s20 = sphi 0, %s18
      %s21 = sphi 0, %s19
      %s22 = sphi 0, %s20
      %s23 = sphi 0, %s21
      %s35 = sphi 0, %s37
      %s38 = sphi 0, %s35
      %s39 = sphi 0, %s38
      %s55 = sphi 0, %s39
      %s59 = sphi 0, %s59
      %s61 = sphi 0, %s59
      %s62 = sphi 0, %s61
      %s76 = sphi 0, %s62
      %s80 = sphi 0, %s80
      %s82 = sphi 0, %s80
      %s83 = sphi 0, %s82
      %s97 = sphi 0, %s83
      %s105 = sphi 0, %s107
      %s108 = sphi 0, %s105
      %s109 = sphi 0, %s108
      %s125 = sphi 0, %s109
    $region4: #{outconv_forward.1} parent=1 // loop_header_branch
      %14 = sbr.rel (%p12) target = $region8
    $region5: #{outconv_forward.1} parent=1 // loop_body
      %s16 = ssub.s32 %s11, 1
      %s17 = ssub.s32 %s11, 2
      %s24 = sadd.s32 1, %s19
      %p25 = scmp.ge.s32.totalorder %s24, 1
      %s26 = scalar_select %p25, 0, %s24
      %s27 = sadd.s32 1, %s18
      %s28 = scalar_select %p25, %s27, %s18
      %p29 = scmp.ge.s32.totalorder %s28, 2
      %s30 = scalar_select %p29, 0, %s28
      %s31 = ssub.s32 %s18, %s30
      %s32 = ssub.s32 %s19, %s26
      %s33 = sor.u32 %s31, %s32
      %p34 = scmp.eq.s32.totalorder %s33, 0
      %s36 = sadd.s32 %s35, 1
      %s37 = scalar_select %p34, %s35, %s36
      %p40 = pneg %p34
      %p41 = scmp.eq.s32.totalorder %s11, 1
      %p42 = por %p40, %p41
      %p43 = scmp.ne.s32.totalorder %s35, %s38
      %p44 = scmp.eq.s32.totalorder %s11, 0
      %p45 = por %p43, %p44
      %p46 = scmp.ne.s32.totalorder %s35, %s38
      %p47 = scmp.eq.s32.totalorder %s16, 1
      %p48 = por %p46, %p47
      %p49 = scmp.ne.s32.totalorder %s38, %s39
      %p50 = scmp.eq.s32.totalorder %s16, 0
      %p51 = por %p49, %p50
      %p52 = scmp.ne.s32.totalorder %s38, %s39
      %p53 = scmp.eq.s32.totalorder %s17, 1
      %p54 = por %p52, %p53
      %p56 = scmp.ne.s32.totalorder %s39, %s55
      %p57 = scmp.eq.s32.totalorder %s17, 0
      %p58 = por %p56, %p57
      %s60 = sadd.s32 %s59, 1
      %p63 = scmp.eq.s32.totalorder %s11, 1
      %p64 = scmp.ne.s32.totalorder %s59, %s61
      %p65 = scmp.eq.s32.totalorder %s11, 0
      %p66 = por %p64, %p65
      %p67 = scmp.ne.s32.totalorder %s59, %s61
      %p68 = scmp.eq.s32.totalorder %s16, 1
      %p69 = por %p67, %p68
      %p70 = scmp.ne.s32.totalorder %s61, %s62
      %p71 = scmp.eq.s32.totalorder %s16, 0
      %p72 = por %p70, %p71
      %p73 = scmp.ne.s32.totalorder %s61, %s62
      %p74 = scmp.eq.s32.totalorder %s17, 1
      %p75 = por %p73, %p74
      %p77 = scmp.ne.s32.totalorder %s62, %s76
      %p78 = scmp.eq.s32.totalorder %s17, 0
      %p79 = por %p77, %p78
      %s81 = sadd.s32 %s80, 1
      %p84 = scmp.eq.s32.totalorder %s11, 1
      %p85 = scmp.ne.s32.totalorder %s80, %s82
      %p86 = scmp.eq.s32.totalorder %s11, 0
      %p87 = por %p85, %p86
      %p88 = scmp.ne.s32.totalorder %s80, %s82
      %p89 = scmp.eq.s32.totalorder %s16, 1
      %p90 = por %p88, %p89
      %p91 = scmp.ne.s32.totalorder %s82, %s83
      %p92 = scmp.eq.s32.totalorder %s16, 0
      %p93 = por %p91, %p92
      %p94 = scmp.ne.s32.totalorder %s82, %s83
      %p95 = scmp.eq.s32.totalorder %s17, 1
      %p96 = por %p94, %p95
      %p98 = scmp.ne.s32.totalorder %s83, %s97
      %p99 = scmp.eq.s32.totalorder %s17, 0
      %p100 = por %p98, %p99
      %s101 = ssub.s32 %s18, %s30
      %s102 = ssub.s32 %s19, %s26
      %s103 = sor.u32 %s101, %s102
      %p104 = scmp.eq.s32.totalorder %s103, 0
      %s106 = sadd.s32 %s105, 1
      %s107 = scalar_select %p104, %s105, %s106
      %p110 = pneg %p104
      %p111 = scmp.eq.s32.totalorder %s11, 1
      %p112 = por %p110, %p111
      %p113 = scmp.ne.s32.totalorder %s105, %s108
      %p114 = scmp.eq.s32.totalorder %s11, 0
      %p115 = por %p113, %p114
      %p116 = scmp.ne.s32.totalorder %s105, %s108
      %p117 = scmp.eq.s32.totalorder %s16, 1
      %p118 = por %p116, %p117
      %p119 = scmp.ne.s32.totalorder %s108, %s109
      %p120 = scmp.eq.s32.totalorder %s16, 0
      %p121 = por %p119, %p120
      %p122 = scmp.ne.s32.totalorder %s108, %s109
      %p123 = scmp.eq.s32.totalorder %s17, 1
      %p124 = por %p122, %p123
      %p126 = scmp.ne.s32.totalorder %s109, %s125
      %p127 = scmp.eq.s32.totalorder %s17, 0
      %p128 = por %p126, %p127
      %p129 = scmp.le.s32.totalorder 1, %s11
      %p130 = scmp.lt.s32.totalorder %s11, 3
      %p131 = pnand %p129, %p130
      %p132 = pneg %p131
      // Predicated region
      $region9: #{outconv_forward.1} parent=5 // pred_check
        _
      $region10: #{outconv_forward.1} parent=5 // pred_check_branch
        %134 = sbr.rel (%p131) target = $region12
      $region11: #{outconv_forward.1} parent=5 // pred_region
        %s135 = ssub.s32 %s11, 1
        // Predicated region
        $region13: #{outconv_forward.1} parent=11 // pred_check
          %p136 = pneg %p72
        $region14: #{outconv_forward.1} parent=11 // pred_check_branch
          %138 = sbr.rel (%p136) target = $region16
        $region15: #{outconv_forward.1} parent=11 // pred_region
          %s140 = ssub.s32 64, 64
          %141 = vsyncadd [#allocation3], %s140
          %s143 = sshll.u32 %s1, 4
          %s144 = int_to_ptr.vmem [resolvable:$true] %s143
          %146 = dma.vmem_to_smem %s144, 64, [#allocation2], [#allocation3]
        $region16: #{outconv_forward.1} parent=11 // pred_fallthru
          _
        // Predicated region
        $region17: #{outconv_forward.1} parent=11 // pred_check
          %p147 = pneg %p93
        $region18: #{outconv_forward.1} parent=11 // pred_check_branch
          %149 = sbr.rel (%p147) target = $region20
        $region19: #{outconv_forward.1} parent=11 // pred_region
          %s151 = ssub.s32 16, 16
          %152 = vsyncadd [#allocation5], %s151
          %s154 = sshll.u32 %s2, 4
          %s155 = int_to_ptr.vmem [resolvable:$true] %s154
          %157 = dma.vmem_to_smem %s155, 16, [#allocation4], [#allocation5]
        $region20: #{outconv_forward.1} parent=11 // pred_fallthru
          _
      $region12: #{outconv_forward.1} parent=5 // pred_fallthru
        _
      %p158 = scmp.lt.s32.totalorder %s11, 2
      // Predicated region
      $region21: #{outconv_forward.1} parent=5 // pred_check
        %p159 = pneg %p158
      $region22: #{outconv_forward.1} parent=5 // pred_check_branch
        %161 = sbr.rel (%p159) target = $region24
      $region23: #{outconv_forward.1} parent=5 // pred_region
        // Predicated region
        $region25: #{outconv_forward.1} parent=23 // pred_check
          %p162 = pneg %p45
        $region26: #{outconv_forward.1} parent=23 // pred_check_branch
          %164 = sbr.rel (%p162) target = $region28
        $region27: #{outconv_forward.1} parent=23 // pred_region
          %s165 = smul.u32 2, %s19
          %p166 = scmp.lt.s32.totalorder %s18, 1
          %s167 = scalar_select %p166, %s18, 1
          %p168 = scmp.lt.s32.totalorder %s165, 1
          %s169 = scalar_select %p168, %s165, 1
          %s170 = smul.addr %s167, 2
          %s171 = sadd.s32 %s169, %s170
          %s172 = smul.addr %s171, 4
          %s173 = scalar_lea.vmem %s0, %s172
          %s174 = smul.u32 2, %s19
        $region28: #{outconv_forward.1} parent=23 // pred_fallthru
          _
      $region24: #{outconv_forward.1} parent=5 // pred_fallthru
        _
      %p175 = scmp.le.s32.totalorder 1, %s11
      %p176 = scmp.lt.s32.totalorder %s11, 3
      %p177 = pnand %p175, %p176
      %p178 = pneg %p177
      // Predicated region
      $region29: #{outconv_forward.1} parent=5 // pred_check
        _
      $region30: #{outconv_forward.1} parent=5 // pred_check_branch
        %180 = sbr.rel (%p177) target = $region32
      $region31: #{outconv_forward.1} parent=5 // pred_region
        %s181 = ssub.s32 %s11, 1
        // Predicated region
        $region33: #{outconv_forward.1} parent=31 // pred_check
          %p182 = pneg %p72
        $region34: #{outconv_forward.1} parent=31 // pred_check_branch
          %184 = sbr.rel (%p182) target = $region36
        $region35: #{outconv_forward.1} parent=31 // pred_region
          %185 = dma.done [#allocation3], 64
        $region36: #{outconv_forward.1} parent=31 // pred_fallthru
          _
        // Predicated region
        $region37: #{outconv_forward.1} parent=31 // pred_check
          %p186 = pneg %p93
        $region38: #{outconv_forward.1} parent=31 // pred_check_branch
          %188 = sbr.rel (%p186) target = $region40
        $region39: #{outconv_forward.1} parent=31 // pred_region
          %189 = dma.done [#allocation5], 16
        $region40: #{outconv_forward.1} parent=31 // pred_fallthru
          _
        %190 = sfence
        %s191 = smul.u32 2, %s21
        %p192 = scmp.lt.s32.totalorder %s20, 1
        %s193 = scalar_select %p192, %s20, 1
        %p194 = scmp.lt.s32.totalorder %s191, 1
        %s195 = scalar_select %p194, %s191, 1
        %s196 = smul.addr %s193, 2
        %s197 = sadd.s32 %s195, %s196
        %s198 = smul.addr %s197, 4
        %s199 = scalar_lea.vmem %s0, %s198
        %p200 = pneg %p51
        %p201 = pneg %p48
        %p202 = pneg %p72
        %p203 = pneg %p69
        %p204 = pneg %p93
        %p205 = pneg %p90
        %p206 = pneg %p121
        %p207 = pneg %p118
        %s208 = smul.u32 2, %s21
        %p209 = scmp.lt.s32.totalorder %s20, 1
        %s210 = scalar_select %p209, %s20, 1
        %p211 = scmp.lt.s32.totalorder %s208, 1
        %s212 = scalar_select %p211, %s208, 1
        %s213 = smul.addr %s210, 2
        %s214 = sadd.s32 %s212, %s213
        %s215 = smul.addr %s214, 4
        %s216 = scalar_lea.vmem %s3, %s215
        %s217 = smul.u32 2, %s21
        %p218 = scmp.lt.s32.totalorder %s20, 1
        %s219 = scalar_select %p218, %s20, 1
        %p220 = scmp.lt.s32.totalorder %s217, 1
        %s221 = scalar_select %p220, %s217, 1
        %s222 = smul.addr %s219, 2
        %s223 = sadd.s32 %s221, %s222
        %s224 = smul.addr %s223, 4
        %s225 = scalar_lea.vmem %s0, %s224
        %s226 = smul.u32 2, %s21
        %s227 = smul.u32 2, %s21
        %p228 = scmp.lt.s32.totalorder %s20, 1
        %s229 = scalar_select %p228, %s20, 1
        %p230 = scmp.lt.s32.totalorder %s227, 1
        %s231 = scalar_select %p230, %s227, 1
        %s232 = smul.addr %s229, 2
        %s233 = sadd.s32 %s231, %s232
        %s234 = smul.addr %s233, 4
        %s235 = scalar_lea.vmem %s3, %s234
        %s236 = smul.u32 2, %s21
        %v237 = vld [vmem:[%s225] ss:$4 sm:$0x3]
        %s238 = sld [smem:[#allocation2]]
        %v239 = vstv %s238
        %v240 = vmul.f32 %v237, %v239
        %s241 = scalar_lea.vmem %s225, 1
        %v242 = vld [vmem:[%s241] ss:$4 sm:$0x3]
        %s243 = sld [smem:[#allocation2 + $0x1]]
        %v244 = vstv %s243
        %v245 = vmul.f32 %v242, %v244
        %v246 = vadd.f32 %v240, %v245
        %s247 = scalar_lea.vmem %s225, 2
        %v248 = vld [vmem:[%s247] ss:$4 sm:$0x3]
        %s249 = sld [smem:[#allocation2 + $0x2]]
        %v250 = vstv %s249
        %v251 = vmul.f32 %v248, %v250
        %v252 = vadd.f32 %v246, %v251
        %s253 = scalar_lea.vmem %s225, 3
        %v254 = vld [vmem:[%s253] ss:$4 sm:$0x3]
        %s255 = sld [smem:[#allocation2 + $0x3]]
        %v256 = vstv %s255
        %v257 = vmul.f32 %v254, %v256
        %v258 = vadd.f32 %v252, %v257
        %s259 = sld [smem:[#allocation4]]
        %v260 = vstv %s259
        %v261 = vadd.f32 %v258, %v260
        %v262 = vxor.u32 %v261, 2147483648
        %v263 = vmul.f32 %v262, 1.442695
        %v264 = vpow.pop %v263
        %v265 = vadd.f32 %v264, 1.0
        %v266 = vrcp.pop %v265
        %v267 = vmul.f32 1.0, %v266
        %v268 = vlaneseq
        %vm269 = vcmp.ge.s32.totalorder %v268, 0
        %vm270 = vcmp.lt.s32.totalorder %v268, 256
        %vm271 = vmand %vm269, %vm270
        %272 = vst.msk [vmem:[%s235] ss:$4 sm:$0x3] %vm271, %v267
        %v273 = vld [vmem:[%s225] ss:$4 sm:$0x3]
        %s274 = sld [smem:[#allocation2 + $0x80]]
        %v275 = vstv %s274
        %v276 = vmul.f32 %v273, %v275
        %v277 = vld [vmem:[%s241] ss:$4 sm:$0x3]
        %s278 = sld [smem:[#allocation2 + $0x81]]
        %v279 = vstv %s278
        %v280 = vmul.f32 %v277, %v279
        %v281 = vadd.f32 %v276, %v280
        %v282 = vld [vmem:[%s247] ss:$4 sm:$0x3]
        %s283 = sld [smem:[#allocation2 + $0x82]]
        %v284 = vstv %s283
        %v285 = vmul.f32 %v282, %v284
        %v286 = vadd.f32 %v281, %v285
        %v287 = vld [vmem:[%s253] ss:$4 sm:$0x3]
        %s288 = sld [smem:[#allocation2 + $0x83]]
        %v289 = vstv %s288
        %v290 = vmul.f32 %v287, %v289
        %v291 = vadd.f32 %v286, %v290
        %s292 = sld [smem:[#allocation4 + $0x1]]
        %v293 = vstv %s292
        %v294 = vadd.f32 %v291, %v293
        %v295 = vxor.u32 %v294, 2147483648
        %v296 = vmul.f32 %v295, 1.442695
        %v297 = vpow.pop %v296
        %v298 = vadd.f32 %v297, 1.0
        %v299 = vrcp.pop %v298
        %v300 = vmul.f32 1.0, %v299
        %s301 = scalar_lea.vmem %s235, 1
        %302 = vst.msk [vmem:[%s301] ss:$4 sm:$0x3] %vm271, %v300
        %v303 = vld [vmem:[%s225] ss:$4 sm:$0x3]
        %s304 = sld [smem:[#allocation2 + $0x100]]
        %v305 = vstv %s304
        %v306 = vmul.f32 %v303, %v305
        %v307 = vld [vmem:[%s241] ss:$4 sm:$0x3]
        %s308 = sld [smem:[#allocation2 + $0x101]]
        %v309 = vstv %s308
        %v310 = vmul.f32 %v307, %v309
        %v311 = vadd.f32 %v306, %v310
        %v312 = vld [vmem:[%s247] ss:$4 sm:$0x3]
        %s313 = sld [smem:[#allocation2 + $0x102]]
        %v314 = vstv %s313
        %v315 = vmul.f32 %v312, %v314
        %v316 = vadd.f32 %v311, %v315
        %v317 = vld [vmem:[%s253] ss:$4 sm:$0x3]
        %s318 = sld [smem:[#allocation2 + $0x103]]
        %v319 = vstv %s318
        %v320 = vmul.f32 %v317, %v319
        %v321 = vadd.f32 %v316, %v320
        %s322 = sld [smem:[#allocation4 + $0x2]]
        %v323 = vstv %s322
        %v324 = vadd.f32 %v321, %v323
        %v325 = vxor.u32 %v324, 2147483648
        %v326 = vmul.f32 %v325, 1.442695
        %v327 = vpow.pop %v326
        %v328 = vadd.f32 %v327, 1.0
        %v329 = vrcp.pop %v328
        %v330 = vmul.f32 1.0, %v329
        %s331 = scalar_lea.vmem %s235, 2
        %332 = vst.msk [vmem:[%s331] ss:$4 sm:$0x3] %vm271, %v330
        %s333 = smul.u32 2, %s21
        %p334 = scmp.lt.s32.totalorder %s20, 1
        %s335 = scalar_select %p334, %s20, 1
        %p336 = scmp.lt.s32.totalorder %s333, 1
        %s337 = scalar_select %p336, %s333, 1
        %s338 = smul.addr %s335, 2
        %s339 = sadd.s32 %s337, %s338
        %s340 = smul.addr %s339, 4
        %s341 = scalar_lea.vmem %s3, %s340
        // Predicated region
        $region41: #{outconv_forward.1} parent=31 // pred_check
          %p342 = pneg %p118
        $region42: #{outconv_forward.1} parent=31 // pred_check_branch
          %344 = sbr.rel (%p342) target = $region44
        $region43: #{outconv_forward.1} parent=31 // pred_region
          %s345 = smul.u32 2, %s21
        $region44: #{outconv_forward.1} parent=31 // pred_fallthru
          _
      $region32: #{outconv_forward.1} parent=5 // pred_fallthru
        _
      %p346 = scmp.le.s32.totalorder 2, %s11
      // Predicated region
      $region45: #{outconv_forward.1} parent=5 // pred_check
        %p347 = pneg %p346
      $region46: #{outconv_forward.1} parent=5 // pred_check_branch
        %349 = sbr.rel (%p347) target = $region48
      $region47: #{outconv_forward.1} parent=5 // pred_region
        %s350 = ssub.s32 %s11, 2
        // Predicated region
        $region49: #{outconv_forward.1} parent=47 // pred_check
          %p351 = pneg %p124
        $region50: #{outconv_forward.1} parent=47 // pred_check_branch
          %353 = sbr.rel (%p351) target = $region52
        $region51: #{outconv_forward.1} parent=47 // pred_region
          %s354 = smul.u32 2, %s23
          %p355 = scmp.lt.s32.totalorder %s22, 1
          %s356 = scalar_select %p355, %s22, 1
          %p357 = scmp.lt.s32.totalorder %s354, 1
          %s358 = scalar_select %p357, %s354, 1
          %s359 = smul.addr %s356, 2
          %s360 = sadd.s32 %s358, %s359
          %s361 = smul.addr %s360, 4
          %s362 = scalar_lea.vmem %s3, %s361
        $region52: #{outconv_forward.1} parent=47 // pred_fallthru
          _
      $region48: #{outconv_forward.1} parent=5 // pred_fallthru
        _
    $region6: #{outconv_forward.1} parent=1 // loop_footer
      %s15 = sadd.s32 1, %s11
    $region7: #{outconv_forward.1} parent=1 // loop_footer_branch
      %10 = sbr.rel target = $region3
    $region8: #{outconv_forward.1} parent=1 // loop_exit
      _
    %363 = vsyncpa [#allocation3], 1
    %s364 = scalar_lea.sflag [#allocation3], 1
    %365 = vsyncpa %s364, 1
    %366 = vsyncpa [#allocation5], 1

</llo_original>
